<compile_context>
chip_gen: v7x
topology: tpu7x:2x2x1
jax: 0.10.0
libtpu: 0.0.40
codegen_flags: <defaults>
</compile_context>

<pallas_src>
import functools

import jax
import jax.numpy as jnp
from jax.experimental import pallas as pl
from jax.experimental.pallas import tpu as pltpu


def _round_up(x, m):
    return (x + m - 1) // m * m


# ---------------------------------------------------------------------------
# Fused triplet kernel: shared-weight 2-layer MLP on three batch tiles.
# ---------------------------------------------------------------------------
def _triplet_kernel(x1_ref, x2_ref, x3_ref, w1_ref, b1_ref, w2_ref, b2_ref,
                    o1_ref, o2_ref, o3_ref):
    tm = x1_ref.shape[0]
    # Stack the three tiles along the sublane axis so the MXU sees 3*TM rows
    # per matmul (one RHS push per layer, shared weights).
    x = jnp.concatenate([x1_ref[...], x2_ref[...], x3_ref[...]], axis=0)
    h = jnp.dot(x, w1_ref[...], preferred_element_type=jnp.float32)
    h = jnp.maximum(h + b1_ref[...], 0.0)                       # (3*tm, H)
    o = jnp.dot(h.astype(w2_ref.dtype), w2_ref[...],
                preferred_element_type=jnp.float32) + b2_ref[...]  # (3*tm, E)
    # tm is a multiple of 8, so these slices are sublane-aligned.
    o1_ref[...] = o[:tm].astype(o1_ref.dtype)
    o2_ref[...] = o[tm:2 * tm].astype(o2_ref.dtype)
    o3_ref[...] = o[2 * tm:].astype(o3_ref.dtype)


def _triplet_pallas(x1, x2, x3, w1, b1, w2, b2, *, block_m=512,
                    compute_dtype=None):
    """One pallas_call embedding x1, x2, x3 with the shared MLP."""
    out_dtype = x1.dtype
    if compute_dtype is not None:
        x1, x2, x3 = (v.astype(compute_dtype) for v in (x1, x2, x3))
        w1 = w1.astype(compute_dtype)
        w2 = w2.astype(compute_dtype)

    B, D = x1.shape
    H = w1.shape[1]
    E = w2.shape[1]

    block_m = max(8, block_m - block_m % 8)
    tm = min(_round_up(B, 8), block_m)
    b_pad = _round_up(B, tm)
    if b_pad != B:
        pad = ((0, b_pad - B), (0, 0))
        x1, x2, x3 = (jnp.pad(v, pad) for v in (x1, x2, x3))

    grid = (b_pad // tm,)
    x_spec = pl.BlockSpec((tm, D), lambda i: (i, 0))
    o_spec = pl.BlockSpec((tm, E), lambda i: (i, 0))

    itemsize = jnp.dtype(x1.dtype).itemsize
    cost = pl.CostEstimate(
        flops=2 * 3 * B * (D * H + H * E),
        transcendentals=0,
        bytes_accessed=(3 * b_pad * D + D * H + H + H * E + E) * itemsize
        + 3 * b_pad * E * jnp.dtype(out_dtype).itemsize,
    )

    outs = pl.pallas_call(
        _triplet_kernel,
        out_shape=tuple(
            jax.ShapeDtypeStruct((b_pad, E), out_dtype) for _ in range(3)),
        grid_spec=pltpu.PrefetchScalarGridSpec(
            num_scalar_prefetch=0,
            grid=grid,
            in_specs=[
                x_spec, x_spec, x_spec,                    # batch tiles
                pl.BlockSpec((D, H), lambda i: (0, 0)),    # W1 resident
                pl.BlockSpec((1, H), lambda i: (0, 0)),    # b1 resident
                pl.BlockSpec((H, E), lambda i: (0, 0)),    # W2 resident
                pl.BlockSpec((1, E), lambda i: (0, 0)),    # b2 resident
            ],
            out_specs=[o_spec, o_spec, o_spec],
        ),
        compiler_params=pltpu.CompilerParams(
            dimension_semantics=("parallel",),   # megacore-shardable on v7x
            vmem_limit_bytes=32 << 20,
        ),
        cost_estimate=cost,
    )(x1, x2, x3, w1, b1, w2, b2)

    if b_pad != B:
        outs = tuple(o[:B] for o in outs)
    return outs


# ---------------------------------------------------------------------------
# Single-input embedding path (TripletNet.get_embedding).
# ---------------------------------------------------------------------------
def _embedding_kernel(x_ref, w1_ref, b1_ref, w2_ref, b2_ref, o_ref):
    h = jnp.dot(x_ref[...], w1_ref[...], preferred_element_type=jnp.float32)
    h = jnp.maximum(h + b1_ref[...], 0.0)
    o = jnp.dot(h.astype(w2_ref.dtype), w2_ref[...],
                preferred_element_type=jnp.float32)
    o_ref[...] = (o + b2_ref[...]).astype(o_ref.dtype)


def embedding_net(x, w1, b1, w2, b2, *, block_m=512, compute_dtype=None):
    """Pallas-backed embedding net: relu(x @ W1 + b1) @ W2 + b2 for one input."""
    out_dtype = x.dtype
    if compute_dtype is not None:
        x = x.astype(compute_dtype)
        w1 = w1.astype(compute_dtype)
        w2 = w2.astype(compute_dtype)

    M, D = x.shape
    H = w1.shape[1]
    E = w2.shape[1]

    block_m = max(8, block_m - block_m % 8)
    tm = min(_round_up(M, 8), block_m)
    m_pad = _round_up(M, tm)
    if m_pad != M:
        x = jnp.pad(x, ((0, m_pad - M), (0, 0)))

    itemsize = jnp.dtype(x.dtype).itemsize
    cost = pl.CostEstimate(
        flops=2 * M * (D * H + H * E),
        transcendentals=0,
        bytes_accessed=(m_pad * D + D * H + H + H * E + E) * itemsize
        + m_pad * E * jnp.dtype(out_dtype).itemsize,
    )

    out = pl.pallas_call(
        _embedding_kernel,
        out_shape=jax.ShapeDtypeStruct((m_pad, E), out_dtype),
        grid_spec=pltpu.PrefetchScalarGridSpec(
            num_scalar_prefetch=0,
            grid=(m_pad // tm,),
            in_specs=[
                pl.BlockSpec((tm, D), lambda i: (i, 0)),
                pl.BlockSpec((D, H), lambda i: (0, 0)),
                pl.BlockSpec((1, H), lambda i: (0, 0)),
                pl.BlockSpec((H, E), lambda i: (0, 0)),
                pl.BlockSpec((1, E), lambda i: (0, 0)),
            ],
            out_specs=pl.BlockSpec((tm, E), lambda i: (i, 0)),
        ),
        compiler_params=pltpu.CompilerParams(
            dimension_semantics=("parallel",),
            vmem_limit_bytes=32 << 20,
        ),
        cost_estimate=cost,
    )(x, w1, b1, w2, b2)

    return out if m_pad == M else out[:M]


# ---------------------------------------------------------------------------
# Module-level API mirroring TripletNet.
# ---------------------------------------------------------------------------
@functools.partial(jax.jit, static_argnames=("compute_dtype",))
def triplet_net(x1, x2, x3, params, compute_dtype=None):
    """TripletNet.forward: shared embedding net on x1, x2, x3 — ONE kernel."""
    w1, b1, w2, b2 = params
    return _triplet_pallas(x1, x2, x3, w1, b1, w2, b2,
                           compute_dtype=compute_dtype)


@jax.jit
def get_embedding(x, params):
    """TripletNet.get_embedding equivalent."""
    w1, b1, w2, b2 = params
    return embedding_net(x, w1, b1, w2, b2)


def init_params(key, d_in, d_hidden, d_out, dtype=jnp.float32):
    """Deterministic init mimicking torch.nn.Linear (uniform ±1/sqrt(fan_in))."""
    k1, k2, k3, k4 = jax.random.split(key, 4)
    lim1 = 1.0 / (d_in ** 0.5)
    lim2 = 1.0 / (d_hidden ** 0.5)
    w1 = jax.random.uniform(k1, (d_in, d_hidden), dtype, -lim1, lim1)
    b1 = jax.random.uniform(k2, (1, d_hidden), dtype, -lim1, lim1)
    w2 = jax.random.uniform(k3, (d_hidden, d_out), dtype, -lim2, lim2)
    b2 = jax.random.uniform(k4, (1, d_out), dtype, -lim2, lim2)
    return w1, b1, w2, b2


if __name__ == "__main__":
    B, D, H, E = 8, 32, 128, 32   # batch, input dim, hidden dim, embedding dim

    key = jax.random.PRNGKey(0)
    kp, kx1, kx2, kx3 = jax.random.split(key, 4)

    params = init_params(kp, D, H, E)
    x1 = jax.random.normal(kx1, (B, D), jnp.float32)
    x2 = jax.random.normal(kx2, (B, D), jnp.float32)
    x3 = jax.random.normal(kx3, (B, D), jnp.float32)

    out1, out2, out3 = triplet_net(x1, x2, x3, params)
    emb1 = get_embedding(x1, params)
    jax.block_until_ready((out1, out2, out3, emb1))

    # Cross-check against a plain-JAX reference of the same embedding net.
    w1, b1, w2, b2 = params

    def ref(x):
        return jnp.maximum(x @ w1 + b1, 0.0) @ w2 + b2

    for got, x in ((out1, x1), (out2, x2), (out3, x3), (emb1, x1)):
        assert got.shape == (B, E)
        assert jnp.allclose(got, ref(x), atol=1e-5, rtol=1e-5)

    print("KERNEL_OK")
</pallas_src>

<mosaic_0001>
module attributes {stable_mosaic.version = 11 : i64} {
  func.func @_triplet_kernel(%arg0: i32, %arg1: memref<8x32xf32, #tpu.memory_space<vmem>>, %arg2: memref<8x32xf32, #tpu.memory_space<vmem>>, %arg3: memref<8x32xf32, #tpu.memory_space<vmem>>, %arg4: memref<32x128xf32, #tpu.memory_space<vmem>>, %arg5: memref<1x128xf32, #tpu.memory_space<vmem>>, %arg6: memref<128x32xf32, #tpu.memory_space<vmem>>, %arg7: memref<1x32xf32, #tpu.memory_space<vmem>>, %arg8: memref<8x32xf32, #tpu.memory_space<vmem>>, %arg9: memref<8x32xf32, #tpu.memory_space<vmem>>, %arg10: memref<8x32xf32, #tpu.memory_space<vmem>>) attributes {dimension_semantics = [#tpu.dimension_semantics<parallel>], iteration_bounds = array<i64: 1>, scalar_prefetch = 0 : i64, scratch_operands = 0 : i64, tpu.core_type = #tpu.core_type<tc>, window_params = [{transform_indices = @transform_0, window_bounds = array<i64: 8, 32>}, {transform_indices = @transform_1, window_bounds = array<i64: 8, 32>}, {transform_indices = @transform_2, window_bounds = array<i64: 8, 32>}, {pipeline_mode = #tpu.pipeline_mode<synchronous>, transform_indices = @transform_3, window_bounds = array<i64: 32, 128>}, {pipeline_mode = #tpu.pipeline_mode<synchronous>, transform_indices = @transform_4, window_bounds = array<i64: 1, 128>}, {pipeline_mode = #tpu.pipeline_mode<synchronous>, transform_indices = @transform_5, window_bounds = array<i64: 128, 32>}, {pipeline_mode = #tpu.pipeline_mode<synchronous>, transform_indices = @transform_6, window_bounds = array<i64: 1, 32>}, {transform_indices = @transform_7, window_bounds = array<i64: 8, 32>}, {transform_indices = @transform_8, window_bounds = array<i64: 8, 32>}, {transform_indices = @transform_9, window_bounds = array<i64: 8, 32>}]} {
    %c0 = arith.constant 0 : index
    %c0_0 = arith.constant 0 : index
    %0 = vector.load %arg1[%c0, %c0_0] : memref<8x32xf32, #tpu.memory_space<vmem>>, vector<8x32xf32>
    %c0_1 = arith.constant 0 : index
    %c0_2 = arith.constant 0 : index
    %1 = vector.load %arg2[%c0_1, %c0_2] : memref<8x32xf32, #tpu.memory_space<vmem>>, vector<8x32xf32>
    %c0_3 = arith.constant 0 : index
    %c0_4 = arith.constant 0 : index
    %2 = vector.load %arg3[%c0_3, %c0_4] : memref<8x32xf32, #tpu.memory_space<vmem>>, vector<8x32xf32>
    %3 = tpu.concatenate %0, %1, %2 in 0 : vector<8x32xf32>, vector<8x32xf32>, vector<8x32xf32> -> vector<24x32xf32>
    %c0_5 = arith.constant 0 : index
    %c0_6 = arith.constant 0 : index
    %4 = vector.load %arg4[%c0_5, %c0_6] : memref<32x128xf32, #tpu.memory_space<vmem>>, vector<32x128xf32>
    %cst = arith.constant dense<0.000000e+00> : vector<24x128xf32>
    %5 = tpu.matmul %3, %4, %cst {dimension_numbers = #tpu.dot_dimension_numbers<[1], [0], [0], [1], [0, 0, 1, 1], [], []>} : vector<24x32xf32>, vector<32x128xf32>, vector<24x128xf32> -> vector<24x128xf32>
    %c0_7 = arith.constant 0 : index
    %c0_8 = arith.constant 0 : index
    %6 = vector.load %arg5[%c0_7, %c0_8] : memref<1x128xf32, #tpu.memory_space<vmem>>, vector<1x128xf32>
    %7 = vector.broadcast %6 : vector<1x128xf32> to vector<24x128xf32>
    %8 = arith.addf %5, %7 : vector<24x128xf32>
    %cst_9 = arith.constant 0.000000e+00 : f32
    %9 = vector.broadcast %cst_9 : f32 to vector<24x128xf32>
    %10 = arith.maximumf %8, %9 : vector<24x128xf32>
    %c0_10 = arith.constant 0 : index
    %c0_11 = arith.constant 0 : index
    %11 = vector.load %arg6[%c0_10, %c0_11] : memref<128x32xf32, #tpu.memory_space<vmem>>, vector<128x32xf32>
    %cst_12 = arith.constant dense<0.000000e+00> : vector<24x32xf32>
    %12 = tpu.matmul %10, %11, %cst_12 {dimension_numbers = #tpu.dot_dimension_numbers<[1], [0], [0], [1], [0, 0, 1, 1], [], []>} : vector<24x128xf32>, vector<128x32xf32>, vector<24x32xf32> -> vector<24x32xf32>
    %c0_13 = arith.constant 0 : index
    %c0_14 = arith.constant 0 : index
    %13 = vector.load %arg7[%c0_13, %c0_14] : memref<1x32xf32, #tpu.memory_space<vmem>>, vector<1x32xf32>
    %14 = vector.broadcast %13 : vector<1x32xf32> to vector<24x32xf32>
    %15 = arith.addf %12, %14 : vector<24x32xf32>
    %16 = vector.extract_strided_slice %15 {offsets = [0, 0], sizes = [8, 32], strides = [1, 1]} : vector<24x32xf32> to vector<8x32xf32>
    %c0_15 = arith.constant 0 : index
    %c0_16 = arith.constant 0 : index
    %17 = vector.load %arg8[%c0_15, %c0_16] : memref<8x32xf32, #tpu.memory_space<vmem>>, vector<8x32xf32>
    tpu.vector_store %arg8[%c0_15, %c0_16], %16 {strides = array<i32>} : memref<8x32xf32, #tpu.memory_space<vmem>>, vector<8x32xf32>,
    %18 = vector.extract_strided_slice %15 {offsets = [8, 0], sizes = [8, 32], strides = [1, 1]} : vector<24x32xf32> to vector<8x32xf32>
    %c0_17 = arith.constant 0 : index
    %c0_18 = arith.constant 0 : index
    %19 = vector.load %arg9[%c0_17, %c0_18] : memref<8x32xf32, #tpu.memory_space<vmem>>, vector<8x32xf32>
    tpu.vector_store %arg9[%c0_17, %c0_18], %18 {strides = array<i32>} : memref<8x32xf32, #tpu.memory_space<vmem>>, vector<8x32xf32>,
    %20 = vector.extract_strided_slice %15 {offsets = [16, 0], sizes = [8, 32], strides = [1, 1]} : vector<24x32xf32> to vector<8x32xf32>
    %c0_19 = arith.constant 0 : index
    %c0_20 = arith.constant 0 : index
    %21 = vector.load %arg10[%c0_19, %c0_20] : memref<8x32xf32, #tpu.memory_space<vmem>>, vector<8x32xf32>
    tpu.vector_store %arg10[%c0_19, %c0_20], %20 {strides = array<i32>} : memref<8x32xf32, #tpu.memory_space<vmem>>, vector<8x32xf32>,
    return
  }
  func.func @transform_0(%arg0: i32) -> (i32, i32) {
    %c0_i32 = arith.constant 0 : i32
    %c0_i32_0 = arith.constant 0 : i32
    return %arg0, %c0_i32 : i32, i32
  }
  func.func @transform_1(%arg0: i32) -> (i32, i32) {
    %c0_i32 = arith.constant 0 : i32
    %c0_i32_0 = arith.constant 0 : i32
    return %arg0, %c0_i32 : i32, i32
  }
  func.func @transform_2(%arg0: i32) -> (i32, i32) {
    %c0_i32 = arith.constant 0 : i32
    %c0_i32_0 = arith.constant 0 : i32
    return %arg0, %c0_i32 : i32, i32
  }
  func.func @transform_3(%arg0: i32) -> (i32, i32) {
    %c0_i32 = arith.constant 0 : i32
    %c0_i32_0 = arith.constant 0 : i32
    %c0_i32_1 = arith.constant 0 : i32
    return %c0_i32, %c0_i32_0 : i32, i32
  }
  func.func @transform_4(%arg0: i32) -> (i32, i32) {
    %c0_i32 = arith.constant 0 : i32
    %c0_i32_0 = arith.constant 0 : i32
    %c0_i32_1 = arith.constant 0 : i32
    return %c0_i32, %c0_i32_0 : i32, i32
  }
  func.func @transform_5(%arg0: i32) -> (i32, i32) {
    %c0_i32 = arith.constant 0 : i32
    %c0_i32_0 = arith.constant 0 : i32
    %c0_i32_1 = arith.constant 0 : i32
    return %c0_i32, %c0_i32_0 : i32, i32
  }
  func.func @transform_6(%arg0: i32) -> (i32, i32) {
    %c0_i32 = arith.constant 0 : i32
    %c0_i32_0 = arith.constant 0 : i32
    %c0_i32_1 = arith.constant 0 : i32
    return %c0_i32, %c0_i32_0 : i32, i32
  }
  func.func @transform_7(%arg0: i32) -> (i32, i32) {
    %c0_i32 = arith.constant 0 : i32
    %c0_i32_0 = arith.constant 0 : i32
    return %arg0, %c0_i32 : i32, i32
  }
  func.func @transform_8(%arg0: i32) -> (i32, i32) {
    %c0_i32 = arith.constant 0 : i32
    %c0_i32_0 = arith.constant 0 : i32
    return %arg0, %c0_i32 : i32, i32
  }
  func.func @transform_9(%arg0: i32) -> (i32, i32) {
    %c0_i32 = arith.constant 0 : i32
    %c0_i32_0 = arith.constant 0 : i32
    return %arg0, %c0_i32 : i32, i32
  }
}

</mosaic_0001>

<llo_original>
// kernel: triplet_net.1
$region0: #{triplet_net.1}
  #allocation0 [shape = 'u32[]', space=smem, size = 0x4, offset = 0x4, fixed_abs, tag = 'smem constant byte address 0x4 - core index']
  #allocation1 [shape = 'u32[144,128]{1,0:T(1,128)}', space=vmem, size = 0x12000, scoped, tag = 'internal scratch']
  %s0 = inlined_call_operand.vmem [shape: f32[8,32], index: 0, kind: input, shape index: {}]
  %s1 = inlined_call_operand.vmem [shape: f32[8,32], index: 1, kind: input, shape index: {}]
  %s2 = inlined_call_operand.vmem [shape: f32[8,32], index: 2, kind: input, shape index: {}]
  %s3 = inlined_call_operand.vmem [shape: f32[32,128], index: 3, kind: input, shape index: {}]
  %s4 = inlined_call_operand.vmem [shape: f32[1,128], index: 4, kind: input, shape index: {}]
  %s5 = inlined_call_operand.vmem [shape: f32[128,32], index: 5, kind: input, shape index: {}]
  %s6 = inlined_call_operand.vmem [shape: f32[1,32], index: 6, kind: input, shape index: {}]
  %s7 = inlined_call_operand.hbm [shape: f32[8,32], index: 7, kind: output, shape index: {0}]
  %s8 = inlined_call_operand.hbm [shape: f32[8,32], index: 8, kind: output, shape index: {1}]
  %s9 = inlined_call_operand.hbm [shape: f32[8,32], index: 9, kind: output, shape index: {2}]
  %10 = xla_tuple %s7, %s8, %s9
  %s11 = sld [smem:[#allocation0]]
  $region54: #{triplet_net.1} parent=0
    _
  %s13 = ssub.s32 1, %s11
  %s14 = scalar_select 0, %s13, %s11
  $region1: #{triplet_net.1} parent=0
    #allocation2 [shape = 'u8[4096]{0}', space=vmem, size = 0x1000, scoped, tag = 'output window, operand 0, single buffered']
    #allocation3 [shape = 's32[1]{0}', space=sflag, size = 0x4, scoped, tag = 'scoped memory for triplet_net.1']
    #allocation4 [shape = 'u8[4096]{0}', space=vmem, size = 0x1000, scoped, tag = 'output window, operand 1, single buffered']
    #allocation5 [shape = 's32[1]{0}', space=sflag, size = 0x4, scoped, tag = 'scoped memory for triplet_net.1']
    #allocation6 [shape = 'u8[4096]{0}', space=vmem, size = 0x1000, scoped, tag = 'output window, operand 2, single buffered']
    %15 = vsyncpa [#allocation3], 0
    %16 = vsyncpa [#allocation5], 0
    // Predicated region
    $region2: #{triplet_net.1} parent=1 // pred_check
      _
    $region3: #{triplet_net.1} parent=1 // pred_check_branch
      %18 = sbr.rel (0) target = $region5
    $region4: #{triplet_net.1} parent=1 // pred_region
      _
    $region5: #{triplet_net.1} parent=1 // pred_fallthru
      _
    // Predicated region
    $region6: #{triplet_net.1} parent=1 // pred_check
      _
    $region7: #{triplet_net.1} parent=1 // pred_check_branch
      %20 = sbr.rel (0) target = $region9
    $region8: #{triplet_net.1} parent=1 // pred_region
      _
    $region9: #{triplet_net.1} parent=1 // pred_fallthru
      _
    // Predicated region
    $region10: #{triplet_net.1} parent=1 // pred_check
      _
    $region11: #{triplet_net.1} parent=1 // pred_check_branch
      %22 = sbr.rel (0) target = $region13
    $region12: #{triplet_net.1} parent=1 // pred_region
      _
    $region13: #{triplet_net.1} parent=1 // pred_fallthru
      _
    // Predicated region
    $region14: #{triplet_net.1} parent=1 // pred_check
      _
    $region15: #{triplet_net.1} parent=1 // pred_check_branch
      %24 = sbr.rel (0) target = $region17
    $region16: #{triplet_net.1} parent=1 // pred_region
      _
    $region17: #{triplet_net.1} parent=1 // pred_fallthru
      _
    // Predicated region
    $region18: #{triplet_net.1} parent=1 // pred_check
      _
    $region19: #{triplet_net.1} parent=1 // pred_check_branch
      %26 = sbr.rel (0) target = $region21
    $region20: #{triplet_net.1} parent=1 // pred_region
      _
    $region21: #{triplet_net.1} parent=1 // pred_fallthru
      _
    // Predicated region
    $region22: #{triplet_net.1} parent=1 // pred_check
      _
    $region23: #{triplet_net.1} parent=1 // pred_check_branch
      %28 = sbr.rel (0) target = $region25
    $region24: #{triplet_net.1} parent=1 // pred_region
      _
    $region25: #{triplet_net.1} parent=1 // pred_fallthru
      _
    // Predicated region
    $region26: #{triplet_net.1} parent=1 // pred_check
      _
    $region27: #{triplet_net.1} parent=1 // pred_check_branch
      %30 = sbr.rel (0) target = $region29
    $region28: #{triplet_net.1} parent=1 // pred_region
      _
    $region29: #{triplet_net.1} parent=1 // pred_fallthru
      _
    %v31 = vld [vmem:[%s0] sm:$0xff]
    %v32 = vld [vmem:[%s1] sm:$0xff]
    %v33 = vld [vmem:[%s2] sm:$0xff]
    %v34 = vld [vmem:[%s3] sm:$0xff]
    %v35 = vld [vmem:[%s3 + $0x8] sm:$0xff]
    %v36 = vld [vmem:[%s3 + $0x10] sm:$0xff]
    %v37 = vld [vmem:[%s3 + $0x18] sm:$0xff]
    %v38 = vld [vmem:[%s4] sm:$0x1]
    %v40 = vlaneseq
    %v41 = vshrl.u32 %v40, 7
    %v42 = vsub.s32 0, %v41
    %v43 = vrot.slane %v38, %v42
    %vm45 = vcmask 261120
    %v47 = vsel %vm45, %v31, 0
    %v50 = vsel %vm45, %v32, 0
    %v53 = vsel %vm45, %v33, 0
    %55 = vmatprep.subr.mxu0 0.0
    %56 = vmatpush1.msra.mxu0 %v34
    %57 = vmatprep.subr.mxu0 0.0
    %58 = vmatpush1.msra.mxu0 %v35
    %59 = vmatprep.subr.mxu0 0.0
    %60 = vmatpush1.msra.mxu0 %v36
    %61 = vmatprep.subr.mxu0 0.0
    %62 = vmatpush1.msra.mxu0 %v37
    %63 = vmatprep.subr.mxu0 0.0
    %64 = vmatpush1.msra.mxu0 0.0
    %65 = vmatprep.subr.mxu0 0.0
    %66 = vmatpush1.msra.mxu0 0.0
    %67 = vmatprep.subr.mxu0 0.0
    %68 = vmatpush1.msra.mxu0 0.0
    %69 = vmatprep.subr.mxu0 0.0
    %70 = vmatpush1.msra.mxu0 0.0
    %71 = vmatprep.subr.mxu0 0.0
    %72 = vmatpush1.msra.mxu0 0.0
    %73 = vmatprep.subr.mxu0 0.0
    %74 = vmatpush1.msra.mxu0 0.0
    %75 = vmatprep.subr.mxu0 0.0
    %76 = vmatpush1.msra.mxu0 0.0
    %77 = vmatprep.subr.mxu0 0.0
    %78 = vmatpush1.msra.mxu0 0.0
    %79 = vmatprep.subr.mxu0 0.0
    %80 = vmatpush1.msra.mxu0 0.0
    %81 = vmatprep.subr.mxu0 0.0
    %82 = vmatpush1.msra.mxu0 0.0
    %83 = vmatprep.subr.mxu0 0.0
    %84 = vmatpush1.msra.mxu0 0.0
    %85 = vmatprep.subr.mxu0 0.0
    %86 = vmatpush1.msra.mxu0 0.0
    %87 = vmatprep.subr.mxu0 0.0
    %88 = vmatpush1.msra.mxu0 0.0
    %89 = vmatprep.subr.mxu0 0.0
    %90 = vmatpush1.msra.mxu0 0.0
    %91 = vmatprep.subr.mxu0 0.0
    %92 = vmatpush1.msra.mxu0 0.0
    %93 = vmatprep.subr.mxu0 0.0
    %94 = vmatpush1.msra.mxu0 0.0
    %95 = vmatprep.subr.mxu0 0.0
    %96 = vmatpush1.msra.mxu0 0.0
    %97 = vmatprep.subr.mxu0 0.0
    %98 = vmatpush1.msra.mxu0 0.0
    %99 = vmatprep.subr.mxu0 0.0
    %100 = vmatpush1.msra.mxu0 0.0
    %101 = vmatprep.subr.mxu0 0.0
    %102 = vmatpush1.msra.mxu0 0.0
    %103 = vmatprep.subr.mxu0 0.0
    %104 = vmatpush1.msra.mxu0 0.0
    %105 = vmatprep.subr.mxu0 0.0
    %106 = vmatpush1.msra.mxu0 0.0
    %107 = vmatprep.subr.mxu0 0.0
    %108 = vmatpush1.msra.mxu0 0.0
    %109 = vmatprep.subr.mxu0 0.0
    %110 = vmatpush1.msra.mxu0 0.0
    %111 = vmatprep.subr.mxu0 0.0
    %112 = vmatpush1.msra.mxu0 0.0
    %113 = vmatprep.subr.mxu0 0.0
    %114 = vmatpush1.msra.mxu0 0.0
    %115 = vmatprep.subr.mxu0 0.0
    %116 = vmatpush1.msra.mxu0 0.0
    %117 = vmatprep.subr.mxu0 0.0
    %118 = vmatpush1.msra.mxu0 0.0
    %119 = vmatprep.mubr.f32.mxu0 0.0
    %120 = vmatmul.mubr.f32.gmra.mrb[0].mxu0 %v47
    %v121 = vpop.f32.mrb[0].mxu0
    %v122 = vadd.f32 %v43, %v121
    %v123 = vpop.f32.mrb[0].mxu0
    %124 = vmatprep.mubr.f32.mxu0 0.0
    %125 = vmatmul.mubr.f32.gmra.mrb[0].mxu0 %v50
    %v126 = vpop.f32.mrb[0].mxu0
    %v127 = vadd.f32 %v43, %v126
    %v128 = vpop.f32.mrb[0].mxu0
    %129 = vmatprep.mubr.f32.mxu0 0.0
    %130 = vmatmul.mubr.f32.gmra.mrb[0].mxu0 %v53
    %v131 = vpop.f32.mrb[0].mxu0
    %v132 = vadd.f32 %v43, %v131
    %v133 = vpop.f32.mrb[0].mxu0
    %134 = vdwg.mxu0
    %v135 = vmax.f32 %v122, 0.0
    %v136 = vmax.f32 %v127, 0.0
    %v137 = vmax.f32 %v132, 0.0
    %v138 = vld [vmem:[%s5] sm:$0xff]
    %v139 = vld [vmem:[%s5 + $0x8] sm:$0xff]
    %v140 = vld [vmem:[%s5 + $0x10] sm:$0xff]
    %v141 = vld [vmem:[%s5 + $0x18] sm:$0xff]
    %v142 = vld [vmem:[%s5 + $0x20] sm:$0xff]
    %v143 = vld [vmem:[%s5 + $0x28] sm:$0xff]
    %v144 = vld [vmem:[%s5 + $0x30] sm:$0xff]
    %v145 = vld [vmem:[%s5 + $0x38] sm:$0xff]
    %v146 = vld [vmem:[%s5 + $0x40] sm:$0xff]
    %v147 = vld [vmem:[%s5 + $0x48] sm:$0xff]
    %v148 = vld [vmem:[%s5 + $0x50] sm:$0xff]
    %v149 = vld [vmem:[%s5 + $0x58] sm:$0xff]
    %v150 = vld [vmem:[%s5 + $0x60] sm:$0xff]
    %v151 = vld [vmem:[%s5 + $0x68] sm:$0xff]
    %v152 = vld [vmem:[%s5 + $0x70] sm:$0xff]
    %v153 = vld [vmem:[%s5 + $0x78] sm:$0xff]
    %v154 = vld [vmem:[%s6] sm:$0x1]
    %v156 = vlaneseq
    %v157 = vshrl.u32 %v156, 7
    %v158 = vsub.s32 0, %v157
    %v159 = vrot.slane %v154, %v158
    %161 = vmatprep.subr.mxu0 0.0
    %162 = vmatpush1.msra.mxu0 %v138
    %163 = vmatprep.subr.mxu0 0.0
    %164 = vmatpush1.msra.mxu0 %v139
    %165 = vmatprep.subr.mxu0 0.0
    %166 = vmatpush1.msra.mxu0 %v140
    %167 = vmatprep.subr.mxu0 0.0
    %168 = vmatpush1.msra.mxu0 %v141
    %169 = vmatprep.subr.mxu0 0.0
    %170 = vmatpush1.msra.mxu0 %v142
    %171 = vmatprep.subr.mxu0 0.0
    %172 = vmatpush1.msra.mxu0 %v143
    %173 = vmatprep.subr.mxu0 0.0
    %174 = vmatpush1.msra.mxu0 %v144
    %175 = vmatprep.subr.mxu0 0.0
    %176 = vmatpush1.msra.mxu0 %v145
    %177 = vmatprep.subr.mxu0 0.0
    %178 = vmatpush1.msra.mxu0 %v146
    %179 = vmatprep.subr.mxu0 0.0
    %180 = vmatpush1.msra.mxu0 %v147
    %181 = vmatprep.subr.mxu0 0.0
    %182 = vmatpush1.msra.mxu0 %v148
    %183 = vmatprep.subr.mxu0 0.0
    %184 = vmatpush1.msra.mxu0 %v149
    %185 = vmatprep.subr.mxu0 0.0
    %186 = vmatpush1.msra.mxu0 %v150
    %187 = vmatprep.subr.mxu0 0.0
    %188 = vmatpush1.msra.mxu0 %v151
    %189 = vmatprep.subr.mxu0 0.0
    %190 = vmatpush1.msra.mxu0 %v152
    %191 = vmatprep.subr.mxu0 0.0
    %192 = vmatpush1.msra.mxu0 %v153
    %193 = vmatprep.subr.mxu0 0.0
    %194 = vmatpush1.msra.mxu0 0.0
    %195 = vmatprep.subr.mxu0 0.0
    %196 = vmatpush1.msra.mxu0 0.0
    %197 = vmatprep.subr.mxu0 0.0
    %198 = vmatpush1.msra.mxu0 0.0
    %199 = vmatprep.subr.mxu0 0.0
    %200 = vmatpush1.msra.mxu0 0.0
    %201 = vmatprep.subr.mxu0 0.0
    %202 = vmatpush1.msra.mxu0 0.0
    %203 = vmatprep.subr.mxu0 0.0
    %204 = vmatpush1.msra.mxu0 0.0
    %205 = vmatprep.subr.mxu0 0.0
    %206 = vmatpush1.msra.mxu0 0.0
    %207 = vmatprep.subr.mxu0 0.0
    %208 = vmatpush1.msra.mxu0 0.0
    %209 = vmatprep.subr.mxu0 0.0
    %210 = vmatpush1.msra.mxu0 0.0
    %211 = vmatprep.subr.mxu0 0.0
    %212 = vmatpush1.msra.mxu0 0.0
    %213 = vmatprep.subr.mxu0 0.0
    %214 = vmatpush1.msra.mxu0 0.0
    %215 = vmatprep.subr.mxu0 0.0
    %216 = vmatpush1.msra.mxu0 0.0
    %217 = vmatprep.subr.mxu0 0.0
    %218 = vmatpush1.msra.mxu0 0.0
    %219 = vmatprep.subr.mxu0 0.0
    %220 = vmatpush1.msra.mxu0 0.0
    %221 = vmatprep.subr.mxu0 0.0
    %222 = vmatpush1.msra.mxu0 0.0
    %223 = vmatprep.subr.mxu0 0.0
    %224 = vmatpush1.msra.mxu0 0.0
    %225 = vmatprep.mubr.f32.mxu0 0.0
    %226 = vmatmul.mubr.f32.gmra.mrb[0].mxu0 %v135
    %v227 = vpop.f32.mrb[0].mxu0
    %v228 = vadd.f32 %v159, %v227
    %v229 = vpop.f32.mrb[0].mxu0
    %230 = vmatprep.mubr.f32.mxu0 0.0
    %231 = vmatmul.mubr.f32.gmra.mrb[0].mxu0 %v136
    %v232 = vpop.f32.mrb[0].mxu0
    %v233 = vadd.f32 %v159, %v232
    %v234 = vpop.f32.mrb[0].mxu0
    %235 = vmatprep.mubr.f32.mxu0 0.0
    %236 = vmatmul.mubr.f32.gmra.mrb[0].mxu0 %v137
    %v237 = vpop.f32.mrb[0].mxu0
    %v238 = vadd.f32 %v159, %v237
    %v239 = vpop.f32.mrb[0].mxu0
    %240 = vdwg.mxu0
    %241 = vst.msk [vmem:[#allocation2] sm:$0xff] %vm45, %v228
    %242 = vst.msk [vmem:[#allocation4] sm:$0xff] %vm45, %v233
    %243 = vst.msk [vmem:[#allocation6] sm:$0xff] %vm45, %v238
    // Predicated region
    $region30: #{triplet_net.1} parent=1 // pred_check
      _
    $region31: #{triplet_net.1} parent=1 // pred_check_branch
      %245 = sbr.rel (0) target = $region33
    $region32: #{triplet_net.1} parent=1 // pred_region
      %s247 = ssub.s32 128, 128
      %248 = vsyncadd [#allocation3], %s247
      %s250 = sshll.u32 [#allocation2], 4
      %s251 = int_to_ptr.vmem [resolvable:$true] %s250
      %253 = dma.vmem_to_hbm [thread:$0]  %s251, 128, %s7, [#allocation3]
    $region33: #{triplet_net.1} parent=1 // pred_fallthru
      _
    // Predicated region
    $region34: #{triplet_net.1} parent=1 // pred_check
      _
    $region35: #{triplet_net.1} parent=1 // pred_check_branch
      %255 = sbr.rel (0) target = $region37
    $region36: #{triplet_net.1} parent=1 // pred_region
      %s257 = ssub.s32 128, 128
      %258 = vsyncadd [#allocation5], %s257
      %s260 = sshll.u32 [#allocation4], 4
      %s261 = int_to_ptr.vmem [resolvable:$true] %s260
      %263 = dma.vmem_to_hbm [thread:$0]  %s261, 128, %s8, [#allocation5]
    $region37: #{triplet_net.1} parent=1 // pred_fallthru
      _
    // Predicated region
    $region38: #{triplet_net.1} parent=1 // pred_check
      _
    $region39: #{triplet_net.1} parent=1 // pred_check_branch
      %265 = sbr.rel (0) target = $region41
    $region40: #{triplet_net.1} parent=1 // pred_region
      %s267 = ssub.s32 128, 128
      %268 = vsyncadd [#allocation5], %s267
      %s270 = sshll.u32 [#allocation6], 4
      %s271 = int_to_ptr.vmem [resolvable:$true] %s270
      %273 = dma.vmem_to_hbm [thread:$0]  %s271, 128, %s9, [#allocation5]
    $region41: #{triplet_net.1} parent=1 // pred_fallthru
      _
    // Predicated region
    $region42: #{triplet_net.1} parent=1 // pred_check
      _
    $region43: #{triplet_net.1} parent=1 // pred_check_branch
      %275 = sbr.rel (0) target = $region45
    $region44: #{triplet_net.1} parent=1 // pred_region
      %276 = dma.done [#allocation3], 128
    $region45: #{triplet_net.1} parent=1 // pred_fallthru
      _
    // Predicated region
    $region46: #{triplet_net.1} parent=1 // pred_check
      _
    $region47: #{triplet_net.1} parent=1 // pred_check_branch
      %278 = sbr.rel (0) target = $region49
    $region48: #{triplet_net.1} parent=1 // pred_region
      %279 = dma.done [#allocation5], 128
    $region49: #{triplet_net.1} parent=1 // pred_fallthru
      _
    // Predicated region
    $region50: #{triplet_net.1} parent=1 // pred_check
      _
    $region51: #{triplet_net.1} parent=1 // pred_check_branch
      %281 = sbr.rel (0) target = $region53
    $region52: #{triplet_net.1} parent=1 // pred_region
      %282 = dma.done [#allocation5], 128
    $region53: #{triplet_net.1} parent=1 // pred_fallthru
      _
    %283 = vsyncpa [#allocation3], 1
    %284 = vsyncpa [#allocation5], 1

</llo_original>
